<compile_context>
chip_gen: v5e
topology: v5e:2x2
jax: 0.10.0
libtpu: 0.0.40
codegen_flags: <defaults>
</compile_context>

<pallas_src>
import jax
import jax.numpy as jnp
from jax.experimental import pallas as pl
from jax.experimental.pallas import tpu as pltpu

_LANE = 128                 # TPU lane width (last-dim alignment)
_SUB = 8                    # sublane alignment
_TILE_ELEMS = 512 * 2048    # 4 MiB f32 per tile (per array)
_SMALL_N = 1024             # below this, plain jnp is cheaper than a kernel launch
_VMEM_LIMIT = 48 << 20      # 3 arrays x 2 buffers x 4 MiB = 24 MiB + headroom


def _make_kernel(neg_base, inv_e2m, m2e):
    """Specialize the kernel body on the (static) module buffers."""
    neg_base = float(neg_base)
    inv_e2m = float(inv_e2m)

    if m2e < 0.0:
        # Recovery disabled (module default): consume branch only, no select.
        def kernel(omega_ref, u_ref, out_ref):
            wp = omega_ref[...] * u_ref[...]
            out_ref[...] = neg_base - jnp.abs(wp) * inv_e2m
        return kernel

    m2e = float(m2e)

    def kernel(omega_ref, u_ref, out_ref):
        wp = omega_ref[...] * u_ref[...]
        consume = neg_base - jnp.abs(wp) * inv_e2m
        recover = neg_base - m2e * wp
        out_ref[...] = jnp.where(wp > 0.0, consume, recover)

    return kernel


def _jnp_forward(omega, u_current, neg_base, inv_e2m, m2e):
    """Fused XLA elementwise path for tiny inputs."""
    wp = omega * u_current
    consume = neg_base - jnp.abs(wp) * inv_e2m
    if m2e < 0.0:
        return consume
    recover = neg_base - m2e * wp
    return jnp.where(wp > 0.0, consume, recover)


def reaction_wheel_power(omega, u_current, *, base_power_need=0.0,
                         elec_to_mech_efficiency=1.0,
                         mech_to_elec_efficiency=-1.0):
    """Net power need (W); negative means power is consumed."""
    if elec_to_mech_efficiency <= 0.0:
        raise ValueError("elec_to_mech_eff must be a strictly positive value.")

    omega = jnp.asarray(omega, jnp.float32)
    u_current = jnp.asarray(u_current, jnp.float32)
    assert omega.shape == u_current.shape

    orig_shape = omega.shape
    n_total = int(omega.size)

    neg_base = -float(base_power_need)
    inv_e2m = 1.0 / float(elec_to_mech_efficiency)
    m2e = float(mech_to_elec_efficiency)

    if n_total == 0:
        return jnp.zeros(orig_shape, jnp.float32)

    # ---- tiny inputs: kernel launch overhead would dominate -> plain jnp ----
    if n_total < _SMALL_N:
        return _jnp_forward(omega, u_current, neg_base, inv_e2m, m2e)

    # ---- choose a lane-dense 2D view (static Python math) ----
    ragged = (n_total % _LANE) != 0
    if not ragged:
        # Fast path: exact reshape, no pad copy, no output slice.
        cols = _LANE
        for c in (2048, 1024, 512, 256, 128):
            if n_total % c == 0:
                cols = c
                break
        rows = n_total // cols
        omega2d = omega.reshape(rows, cols)
        u2d = u_current.reshape(rows, cols)
    else:
        # Truly ragged flat count: one pad/slice pass is unavoidable here.
        cols = 1024
        rows = pl.cdiv(n_total, cols)
        padded_total = rows * cols

        def _pack(x):
            flat = x.reshape(-1)
            return jnp.pad(flat, (0, padded_total - n_total)).reshape(rows, cols)

        omega2d = _pack(omega)
        u2d = _pack(u_current)

    # ---- row tile: as big as the VMEM budget allows; last block may be partial ----
    tb_cap = max(_SUB, (_TILE_ELEMS // cols) // _SUB * _SUB)
    if rows <= tb_cap:
        tb = rows                       # single block covers the full row extent
        grid = (1,)
    else:
        tb = tb_cap                     # multiple of 8; partial last block is masked
        grid = (pl.cdiv(rows, tb),)

    n_elems = rows * cols
    cost = pl.CostEstimate(flops=4 * n_elems, transcendentals=0,
                           bytes_accessed=12 * n_elems)

    out2d = pl.pallas_call(
        _make_kernel(neg_base, inv_e2m, m2e),
        out_shape=jax.ShapeDtypeStruct((rows, cols), jnp.float32),
        grid=grid,
        in_specs=[
            pl.BlockSpec((tb, cols), lambda i: (i, 0)),   # omega
            pl.BlockSpec((tb, cols), lambda i: (i, 0)),   # u_current
        ],
        out_specs=pl.BlockSpec((tb, cols), lambda i: (i, 0)),
        compiler_params=pltpu.CompilerParams(
            dimension_semantics=("parallel",),
            vmem_limit_bytes=_VMEM_LIMIT),
        cost_estimate=cost,
    )(omega2d, u2d)

    if ragged:
        return out2d.reshape(-1)[:n_total].reshape(orig_shape)
    return out2d.reshape(orig_shape)


def _reference(omega, u_current, base, e2m, m2e):
    wp = omega * u_current
    consume = base + jnp.abs(wp) / e2m
    recover = base + m2e * wp
    return -jnp.where(jnp.logical_or(m2e < 0.0, wp > 0.0), consume, recover)


if __name__ == "__main__":
    key = jax.random.PRNGKey(0)
    k1, k2, k3, k4, k5, k6 = jax.random.split(key, 6)

    # Main (lane-aligned) shape -> Pallas fast path.
    B, N = 8, 256
    omega = jax.random.normal(k1, (B, N), dtype=jnp.float32) * 50.0      # rad/s
    u_current = jax.random.normal(k2, (B, N), dtype=jnp.float32) * 0.1   # N*m

    # Ragged shape (>= threshold, not a multiple of 128) -> padded Pallas path.
    omega_r = jax.random.normal(k3, (5, 250), dtype=jnp.float32) * 50.0
    u_r = jax.random.normal(k4, (5, 250), dtype=jnp.float32) * 0.1

    # Tiny shape -> jnp escape hatch.
    omega_s = jax.random.normal(k5, (3, 7), dtype=jnp.float32) * 50.0
    u_s = jax.random.normal(k6, (3, 7), dtype=jnp.float32) * 0.1

    cases = [
        dict(base_power_need=5.0, elec_to_mech_efficiency=0.9,
             mech_to_elec_efficiency=-1.0),   # recovery disabled (default path)
        dict(base_power_need=5.0, elec_to_mech_efficiency=0.9,
             mech_to_elec_efficiency=0.5),    # recovery enabled
    ]

    ok = True
    for cfg in cases:
        for (om, uc) in [(omega, u_current), (omega_r, u_r), (omega_s, u_s)]:
            out = reaction_wheel_power(om, uc, **cfg)
            out = jax.block_until_ready(out)
            ref = _reference(om, uc,
                             jnp.float32(cfg["base_power_need"]),
                             jnp.float32(cfg["elec_to_mech_efficiency"]),
                             jnp.float32(cfg["mech_to_elec_efficiency"]))
            ok &= bool(jnp.allclose(out, ref, rtol=1e-6, atol=1e-5))

    if ok:
        print("KERNEL_OK")
</pallas_src>

<mosaic_0001>
module attributes {stable_mosaic.version = 11 : i64} {
  func.func @kernel(%arg0: i32, %arg1: memref<1x2048xf32, #tpu.memory_space<vmem>>, %arg2: memref<1x2048xf32, #tpu.memory_space<vmem>>, %arg3: memref<1x2048xf32, #tpu.memory_space<vmem>>) attributes {dimension_semantics = [#tpu.dimension_semantics<parallel>], iteration_bounds = array<i64: 1>, scalar_prefetch = 0 : i64, scratch_operands = 0 : i64, tpu.core_type = #tpu.core_type<tc>, window_params = [{transform_indices = @transform_0, window_bounds = array<i64: 1, 2048>}, {transform_indices = @transform_1, window_bounds = array<i64: 1, 2048>}, {transform_indices = @transform_2, window_bounds = array<i64: 1, 2048>}]} {
    %c0 = arith.constant 0 : index
    %c0_0 = arith.constant 0 : index
    %0 = vector.load %arg1[%c0, %c0_0] : memref<1x2048xf32, #tpu.memory_space<vmem>>, vector<1x2048xf32>
    %c0_1 = arith.constant 0 : index
    %c0_2 = arith.constant 0 : index
    %1 = vector.load %arg2[%c0_1, %c0_2] : memref<1x2048xf32, #tpu.memory_space<vmem>>, vector<1x2048xf32>
    %2 = arith.mulf %0, %1 : vector<1x2048xf32>
    %3 = math.absf %2 : vector<1x2048xf32>
    %cst = arith.constant 1.11111116 : f32
    %4 = vector.broadcast %cst : f32 to vector<1x2048xf32>
    %5 = arith.mulf %3, %4 : vector<1x2048xf32>
    %cst_3 = arith.constant -5.000000e+00 : f32
    %6 = vector.broadcast %cst_3 : f32 to vector<1x2048xf32>
    %7 = arith.subf %6, %5 : vector<1x2048xf32>
    %c0_4 = arith.constant 0 : index
    %c0_5 = arith.constant 0 : index
    %8 = vector.load %arg3[%c0_4, %c0_5] : memref<1x2048xf32, #tpu.memory_space<vmem>>, vector<1x2048xf32>
    tpu.vector_store %arg3[%c0_4, %c0_5], %7 {strides = array<i32>} : memref<1x2048xf32, #tpu.memory_space<vmem>>, vector<1x2048xf32>,
    return
  }
  func.func @transform_0(%arg0: i32) -> (i32, i32) {
    %c0_i32 = arith.constant 0 : i32
    %c0_i32_0 = arith.constant 0 : i32
    return %arg0, %c0_i32 : i32, i32
  }
  func.func @transform_1(%arg0: i32) -> (i32, i32) {
    %c0_i32 = arith.constant 0 : i32
    %c0_i32_0 = arith.constant 0 : i32
    return %arg0, %c0_i32 : i32, i32
  }
  func.func @transform_2(%arg0: i32) -> (i32, i32) {
    %c0_i32 = arith.constant 0 : i32
    %c0_i32_0 = arith.constant 0 : i32
    return %arg0, %c0_i32 : i32, i32
  }
}

</mosaic_0001>

<llo_original>
// kernel: tpu_custom_call.1
$region0: #{tpu_custom_call.1}
  #allocation0 [shape = 'u32[]', space=smem, size = 0x4, offset = 0x4, fixed_abs, tag = 'smem constant byte address 0x4 - core index']
  #allocation1 [shape = 'u32[72,128]{1,0:T(1,128)}', space=vmem, size = 0x9000, scoped, tag = 'internal scratch']
  %s0 = inlined_call_operand.hbm [shape: f32[1,2048], index: 0, kind: input, shape index: {}]
  %s1 = inlined_call_operand.hbm [shape: f32[1,2048], index: 1, kind: input, shape index: {}]
  %s2 = inlined_call_operand.hbm [shape: f32[1,2048], index: 2, kind: output, shape index: {}]
  %s3 = sld [smem:[#allocation0]]
  $region26: #{tpu_custom_call.1} parent=0
    _
  %s5 = ssub.s32 1, %s3
  %s6 = scalar_select 0, %s5, %s3
  $region1: #{tpu_custom_call.1} parent=0
    #allocation2 [shape = 'u8[8192]{0}', space=vmem, size = 0x2000, scoped, tag = 'input window, operand 0, single buffered']
    #allocation3 [shape = 's32[1]{0}', space=sflag, size = 0x4, scoped, tag = 'scoped memory for tpu_custom_call.1']
    #allocation4 [shape = 's32[1]{0}', space=sflag, size = 0x4, scoped, tag = 'scoped memory for tpu_custom_call.1']
    #allocation5 [shape = 'u8[8192]{0}', space=vmem, size = 0x2000, scoped, tag = 'input window, operand 1, single buffered']
    #allocation6 [shape = 's32[1]{0}', space=sflag, size = 0x4, scoped, tag = 'scoped memory for tpu_custom_call.1']
    #allocation7 [shape = 'u8[8192]{0}', space=vmem, size = 0x2000, scoped, tag = 'output window, operand 0, single buffered']
    %7 = vsyncpa [#allocation3], 0
    %8 = vsyncpa [#allocation6], 0
    %9 = vsyncpa [#allocation4], 0
    // Predicated region
    $region2: #{tpu_custom_call.1} parent=1 // pred_check
      _
    $region3: #{tpu_custom_call.1} parent=1 // pred_check_branch
      %11 = sbr.rel (0) target = $region5
    $region4: #{tpu_custom_call.1} parent=1 // pred_region
      %13 = vsyncadd [#allocation3], 0
      %s15 = sshll.u32 %s0, 4
      %s16 = int_to_ptr.hbm [resolvable:$true] %s15
      %s17 = sshll.u32 [#allocation2], 4
      %s18 = int_to_ptr.vmem [resolvable:$true] %s17
      %20 = dma.hbm_to_vmem [thread:$0]  %s16, 256, %s18, [#allocation3]
    $region5: #{tpu_custom_call.1} parent=1 // pred_fallthru
      _
    // Predicated region
    $region6: #{tpu_custom_call.1} parent=1 // pred_check
      _
    $region7: #{tpu_custom_call.1} parent=1 // pred_check_branch
      %22 = sbr.rel (0) target = $region9
    $region8: #{tpu_custom_call.1} parent=1 // pred_region
      %24 = vsyncadd [#allocation6], 0
      %s26 = sshll.u32 %s1, 4
      %s27 = int_to_ptr.hbm [resolvable:$true] %s26
      %s28 = sshll.u32 [#allocation5], 4
      %s29 = int_to_ptr.vmem [resolvable:$true] %s28
      %31 = dma.hbm_to_vmem [thread:$0]  %s27, 256, %s29, [#allocation6]
    $region9: #{tpu_custom_call.1} parent=1 // pred_fallthru
      _
    // Predicated region
    $region10: #{tpu_custom_call.1} parent=1 // pred_check
      _
    $region11: #{tpu_custom_call.1} parent=1 // pred_check_branch
      %33 = sbr.rel (0) target = $region13
    $region12: #{tpu_custom_call.1} parent=1 // pred_region
      %35 = dma.done [#allocation3], 256
    $region13: #{tpu_custom_call.1} parent=1 // pred_fallthru
      _
    // Predicated region
    $region14: #{tpu_custom_call.1} parent=1 // pred_check
      _
    $region15: #{tpu_custom_call.1} parent=1 // pred_check_branch
      %37 = sbr.rel (0) target = $region17
    $region16: #{tpu_custom_call.1} parent=1 // pred_region
      %39 = dma.done [#allocation6], 256
    $region17: #{tpu_custom_call.1} parent=1 // pred_fallthru
      _
    %v40 = vld [vmem:[#allocation2] sm:$0xff]
    %v41 = vld [vmem:[#allocation2 + $0x8] sm:$0xff]
    %v42 = vld [vmem:[#allocation5] sm:$0xff]
    %v43 = vld [vmem:[#allocation5 + $0x8] sm:$0xff]
    %v44 = vmul.f32 %v40, %v42
    %v45 = vmul.f32 %v41, %v43
    %v46 = vand.u32 2147483647, %v44
    %v47 = vand.u32 2147483647, %v45
    %v48 = vmul.f32 %v46, 1.1111112
    %v49 = vmul.f32 %v47, 1.1111112
    %v50 = vsub.f32 -5.0, %v48
    %v51 = vsub.f32 -5.0, %v49
    %52 = vst [vmem:[#allocation7] sm:$0xff] %v50
    %53 = vst [vmem:[#allocation7 + $0x8] sm:$0xff] %v51
    // Predicated region
    $region18: #{tpu_custom_call.1} parent=1 // pred_check
      _
    $region19: #{tpu_custom_call.1} parent=1 // pred_check_branch
      %55 = sbr.rel (0) target = $region21
    $region20: #{tpu_custom_call.1} parent=1 // pred_region
      %57 = vsyncadd [#allocation4], 0
      %s59 = sshll.u32 [#allocation7], 4
      %s60 = int_to_ptr.vmem [resolvable:$true] %s59
      %s61 = sshll.u32 %s2, 4
      %s62 = int_to_ptr.hbm [resolvable:$true] %s61
      %64 = dma.vmem_to_hbm [thread:$0]  %s60, 256, %s62, [#allocation4]
    $region21: #{tpu_custom_call.1} parent=1 // pred_fallthru
      _
    // Predicated region
    $region22: #{tpu_custom_call.1} parent=1 // pred_check
      _
    $region23: #{tpu_custom_call.1} parent=1 // pred_check_branch
      %66 = sbr.rel (0) target = $region25
    $region24: #{tpu_custom_call.1} parent=1 // pred_region
      %68 = dma.done [#allocation4], 256
    $region25: #{tpu_custom_call.1} parent=1 // pred_fallthru
      _
    %69 = vsyncpa [#allocation3], 1
    %70 = vsyncpa [#allocation6], 1
    %71 = vsyncpa [#allocation4], 1

</llo_original>
